<compile_context>
chip_gen: v7x
topology: tpu7x:2x2x1
jax: 0.10.0
libtpu: 0.0.40
codegen_flags: <defaults>
</compile_context>

<pallas_src>
import functools

import jax
import jax.numpy as jnp
from jax.experimental import pallas as pl
from jax.experimental.pallas import tpu as pltpu


# ----------------------------- Pallas kernels ------------------------------ #

def _fused_matmul_kernel(*refs, apply_relu, has_residual):
    # out = [relu]( (x @ w) * scale + shift [+ residual] )
    if has_residual:
        x_ref, w_ref, scale_ref, shift_ref, res_ref, o_ref = refs
    else:
        x_ref, w_ref, scale_ref, shift_ref, o_ref = refs
    acc = jnp.dot(x_ref[...], w_ref[...], preferred_element_type=jnp.float32)
    acc = acc * scale_ref[...] + shift_ref[...]
    if has_residual:
        acc = acc + res_ref[...]
    if apply_relu:
        acc = jnp.maximum(acc, 0.0)
    o_ref[...] = acc.astype(o_ref.dtype)


def fused_matmul_bn(x, w, scale, shift, residual=None, apply_relu=False):
    """out[g] = [relu]((x[g] @ w[g]) * scale[g] + shift[g] [+ residual[g]]).

    x: (G, M, K) bf16, w: (G, K, C) bf16, scale/shift: (G, 1, C) f32,
    residual: optional (G, M, C) f32. Returns (G, M, C) f32.
    """
    G, M, K = x.shape
    Gw, Kw, C = w.shape
    assert G == Gw and K == Kw

    # M tiling: full M when small, 256-row tiles otherwise (parallel grid).
    tm = 256 if (M > 256 and M % 256 == 0) else M
    grid = (G, M // tm)

    in_specs = [
        pl.BlockSpec((None, tm, K), lambda g, i: (g, i, 0)),
        pl.BlockSpec((None, K, C), lambda g, i: (g, 0, 0)),
        pl.BlockSpec((None, 1, C), lambda g, i: (g, 0, 0)),
        pl.BlockSpec((None, 1, C), lambda g, i: (g, 0, 0)),
    ]
    args = [x, w, scale, shift]
    has_residual = residual is not None
    if has_residual:
        in_specs.append(pl.BlockSpec((None, tm, C), lambda g, i: (g, i, 0)))
        args.append(residual)

    kernel = functools.partial(_fused_matmul_kernel,
                               apply_relu=apply_relu, has_residual=has_residual)
    return pl.pallas_call(
        kernel,
        out_shape=jax.ShapeDtypeStruct((G, M, C), jnp.float32),
        grid=grid,
        in_specs=in_specs,
        out_specs=pl.BlockSpec((None, tm, C), lambda g, i: (g, i, 0)),
        compiler_params=pltpu.CompilerParams(
            dimension_semantics=("parallel", "parallel")),
    )(*args)


def _head_kernel(y_ref, w_ref, b_ref, emb_ref, logit_ref):
    # y: (N, H*W, C); fused AdaptiveAvgPool2d((1,1)) + flatten + Linear.
    emb = jnp.mean(y_ref[...], axis=1)                       # (N, C) f32
    emb_ref[...] = emb
    logit_ref[...] = (jnp.dot(emb, w_ref[...],
                              preferred_element_type=jnp.float32)
                      + b_ref[...])


def head_pool_classifier(y, W, b):
    """y: (G, N, H*W, C) f32, W: (G, C, nc) f32, b: (G, 1, nc) f32."""
    G, N, HW, C = y.shape
    nc = W.shape[-1]
    return pl.pallas_call(
        _head_kernel,
        out_shape=(jax.ShapeDtypeStruct((G, N, C), jnp.float32),
                   jax.ShapeDtypeStruct((G, N, nc), jnp.float32)),
        grid=(G,),
        in_specs=[
            pl.BlockSpec((None, N, HW, C), lambda g: (g, 0, 0, 0)),
            pl.BlockSpec((None, C, nc), lambda g: (g, 0, 0)),
            pl.BlockSpec((None, 1, nc), lambda g: (g, 0, 0)),
        ],
        out_specs=(pl.BlockSpec((None, N, C), lambda g: (g, 0, 0)),
                   pl.BlockSpec((None, N, nc), lambda g: (g, 0, 0))),
        compiler_params=pltpu.CompilerParams(
            dimension_semantics=("parallel",)),
    )(y, W, b)


# --------------------------- conv helpers (glue) ---------------------------- #

def im2col_3x3(x, stride):
    """x: (G, N, H, W, C) f32 -> (G, N*Ho*Wo, 9*C) bf16 patches (padding=1)."""
    G, N, H, W, C = x.shape
    xp = jnp.pad(x, ((0, 0), (0, 0), (1, 1), (1, 1), (0, 0)))
    Ho = (H + 2 - 3) // stride + 1
    Wo = (W + 2 - 3) // stride + 1
    taps = []
    for dy in range(3):
        for dx in range(3):
            taps.append(xp[:, :, dy:dy + stride * (Ho - 1) + 1:stride,
                           dx:dx + stride * (Wo - 1) + 1:stride, :])
    patches = jnp.concatenate(taps, axis=-1)                 # (G, N, Ho, Wo, 9C)
    return patches.reshape(G, N * Ho * Wo, 9 * C).astype(jnp.bfloat16), (Ho, Wo)


def conv3x3_bn(x, wmat, bn, stride=1, residual=None, apply_relu=True):
    # x: (G, N, H, W, Cin), wmat: (G, 9*Cin, Cout) bf16 (matmul form)
    G, N, H, W, Cin = x.shape
    Cout = wmat.shape[-1]
    patches, (Ho, Wo) = im2col_3x3(x, stride)
    res = None
    if residual is not None:
        res = residual.reshape(G, N * Ho * Wo, Cout)
    out = fused_matmul_bn(patches, wmat, bn[0], bn[1], res, apply_relu)
    return out.reshape(G, N, Ho, Wo, Cout)


def conv1x1_bn(x, wmat, bn, stride):
    # downsample shortcut: strided 1x1 conv + BN, no relu
    G, N, H, W, Cin = x.shape
    xs = x[:, :, ::stride, ::stride, :]
    Ho, Wo = xs.shape[2], xs.shape[3]
    xr = xs.reshape(G, N * Ho * Wo, Cin).astype(jnp.bfloat16)
    out = fused_matmul_bn(xr, wmat, bn[0], bn[1], None, False)
    return out.reshape(G, N, Ho, Wo, wmat.shape[-1])


# ------------------------- parameter initialization ------------------------- #

def _bn_params(key, g, c):
    k1, k2 = jax.random.split(key)
    gamma = 1.0 + 0.1 * jax.random.normal(k1, (g, 1, c), jnp.float32)
    beta = 0.1 * jax.random.normal(k2, (g, 1, c), jnp.float32)
    eps = 1e-5
    # running_mean=0, running_var=1 (fresh BatchNorm2d buffers), eval-mode fold.
    scale = gamma / jnp.sqrt(1.0 + eps)
    shift = beta
    return scale, shift


def _conv3x3_w(key, g, cin, cout):
    fan_in = 9 * cin
    w = jax.random.normal(key, (g, 3, 3, cin, cout), jnp.float32) * (2.0 / fan_in) ** 0.5
    return w.reshape(g, 9 * cin, cout).astype(jnp.bfloat16)      # matmul form, bf16


def _conv1x1_w(key, g, cin, cout):
    w = jax.random.normal(key, (g, cin, cout), jnp.float32) * (2.0 / cin) ** 0.5
    return w.astype(jnp.bfloat16)


def _make_block(key, g, cin, cout, stride):
    ks = jax.random.split(key, 6)
    p = {
        "conv1": _conv3x3_w(ks[0], g, cin, cout),
        "bn1": _bn_params(ks[1], g, cout),
        "conv2": _conv3x3_w(ks[2], g, cout, cout),
        "bn2": _bn_params(ks[3], g, cout),
        "downsample": None,
        "stride": stride,
    }
    if stride != 1 or cin != cout:          # BasicBlock.expansion == 1
        p["downsample"] = (_conv1x1_w(ks[4], g, cin, cout), _bn_params(ks[5], g, cout))
    return p


def _make_layer(key, g, cin, cout, num_blocks, stride):
    strides = [stride] + [1] * (num_blocks - 1)
    ks = jax.random.split(key, num_blocks)
    blocks = []
    for k, s in zip(ks, strides):
        blocks.append(_make_block(k, g, cin, cout, s))
        cin = cout
    return blocks, cin


def init_cifar_resnet(key, layers=(1, 1, 1, 1), num_classes=10, number_net=2):
    keys = jax.random.split(key, 8)
    params = {"number_net": number_net}
    params["conv1"] = _conv3x3_w(keys[0], 1, 3, 64)
    params["bn1"] = _bn_params(keys[1], 1, 64)
    inplanes = 64
    params["layer1"], inplanes = _make_layer(keys[2], 1, inplanes, 64, layers[0], 1)
    params["layer2"], inplanes = _make_layer(keys[3], 1, inplanes, 128, layers[1], 2)
    # All `number_net` branches stacked on a leading group axis G.
    g = number_net
    params["layer3"], inp3 = _make_layer(keys[4], g, inplanes, 256, layers[2], 2)
    params["layer4"], inp4 = _make_layer(keys[5], g, inp3, 512, layers[3], 2)
    kw, kb = jax.random.split(keys[6])
    params["classifier_W"] = (jax.random.normal(kw, (g, inp4, num_classes), jnp.float32)
                              * (1.0 / inp4) ** 0.5)
    params["classifier_b"] = 0.01 * jax.random.normal(kb, (g, 1, num_classes), jnp.float32)
    return params


# --------------------------------- forward ---------------------------------- #

def basic_block_forward(x, p):
    stride = p["stride"]
    out = conv3x3_bn(x, p["conv1"], p["bn1"], stride=stride,
                     residual=None, apply_relu=True)
    if p["downsample"] is not None:
        wd, bnd = p["downsample"]
        shortcut = conv1x1_bn(x, wd, bnd, stride)
    else:
        shortcut = x
    # bn2(conv2(out)) + shortcut, then relu — all fused in one kernel call.
    out = conv3x3_bn(out, p["conv2"], p["bn2"], stride=1,
                     residual=shortcut, apply_relu=True)
    return out


def cifar_resnet_forward(params, x_nchw):
    G = params["number_net"]
    # NCHW -> NHWC with a leading group axis of 1 for the shared trunk.
    x = jnp.transpose(x_nchw, (0, 2, 3, 1)).astype(jnp.float32)[None]   # (1,N,H,W,3)
    x = conv3x3_bn(x, params["conv1"], params["bn1"], stride=1,
                   residual=None, apply_relu=True)
    for blk in params["layer1"]:
        x = basic_block_forward(x, blk)
    for blk in params["layer2"]:
        x = basic_block_forward(x, blk)

    shared = x[0]                                                       # (N,H,W,128)
    # Batch the identical branches along the group axis G.
    y3 = jnp.broadcast_to(shared[None], (G,) + shared.shape)
    for blk in params["layer3"]:
        y3 = basic_block_forward(y3, blk)
    y4 = y3
    for blk in params["layer4"]:
        y4 = basic_block_forward(y4, blk)

    # Fused avgpool + classifier over all branches in one launch.
    N, H4, W4, C4 = y4.shape[1:]
    emb_all, logit_all = head_pool_classifier(
        y4.reshape(G, N, H4 * W4, C4),
        params["classifier_W"], params["classifier_b"])

    shared_nchw = jnp.transpose(shared, (0, 3, 1, 2))
    logits, embedding, f = [], [], []
    for i in range(G):
        f.append(shared_nchw)                                # input to branch i
        f.append(jnp.transpose(y3[i], (0, 3, 1, 2)))         # layer3_i output
        f.append(jnp.transpose(y4[i], (0, 3, 1, 2)))         # layer4_i output
        embedding.append(emb_all[i])
        logits.append(logit_all[i])
    return logits, embedding, f


# ----------------------------------- main ------------------------------------ #

if __name__ == "__main__":
    key = jax.random.PRNGKey(0)
    kp, kx = jax.random.split(key)
    NUM_CLASSES = 10
    NUMBER_NET = 2
    params = init_cifar_resnet(kp, layers=(1, 1, 1, 1),
                               num_classes=NUM_CLASSES, number_net=NUMBER_NET)
    # Small input consistent with the module: NCHW, 3 input channels.
    x = jax.random.normal(kx, (2, 3, 16, 16), jnp.float32)

    logits, embedding, f = cifar_resnet_forward(params, x)
    jax.block_until_ready((logits, embedding, f))

    assert len(logits) == NUMBER_NET and len(embedding) == NUMBER_NET
    assert len(f) == 3 * NUMBER_NET
    assert logits[0].shape == (2, NUM_CLASSES)
    assert embedding[0].shape == (2, 512)
    assert f[0].shape == (2, 128, 8, 8)   # shared layer2 output (NCHW)
    assert f[1].shape == (2, 256, 4, 4)   # layer3 output
    assert f[2].shape == (2, 512, 2, 2)   # layer4 output
    for v in logits + embedding + f:
        assert bool(jnp.all(jnp.isfinite(v)))
    print("KERNEL_OK")
</pallas_src>

<mosaic_0001>
module attributes {stable_mosaic.version = 11 : i64} {
  func.func @_fused_matmul_kernel(%arg0: i32, %arg1: i32, %arg2: memref<1x256x27xbf16, #tpu.memory_space<vmem>>, %arg3: memref<1x27x64xbf16, #tpu.memory_space<vmem>>, %arg4: memref<1x1x64xf32, #tpu.memory_space<vmem>>, %arg5: memref<1x1x64xf32, #tpu.memory_space<vmem>>, %arg6: memref<1x256x64xf32, #tpu.memory_space<vmem>>) attributes {dimension_semantics = [#tpu.dimension_semantics<parallel>, #tpu.dimension_semantics<parallel>], iteration_bounds = array<i64: 1, 2>, scalar_prefetch = 0 : i64, scratch_operands = 0 : i64, tpu.core_type = #tpu.core_type<tc>, window_params = [{transform_indices = @transform_0, window_bounds = array<i64: 1, 256, 27>}, {transform_indices = @transform_1, window_bounds = array<i64: 1, 27, 64>}, {transform_indices = @transform_2, window_bounds = array<i64: 1, 1, 64>}, {transform_indices = @transform_3, window_bounds = array<i64: 1, 1, 64>}, {transform_indices = @transform_4, window_bounds = array<i64: 1, 256, 64>}]} {
    %c0 = arith.constant 0 : index
    %c0_0 = arith.constant 0 : index
    %c0_1 = arith.constant 0 : index
    %0 = vector.load %arg2[%c0, %c0_0, %c0_1] : memref<1x256x27xbf16, #tpu.memory_space<vmem>>, vector<1x256x27xbf16>
    %1 = vector.shape_cast %0 : vector<1x256x27xbf16> to vector<256x27xbf16>
    %c0_2 = arith.constant 0 : index
    %c0_3 = arith.constant 0 : index
    %c0_4 = arith.constant 0 : index
    %2 = vector.load %arg3[%c0_2, %c0_3, %c0_4] : memref<1x27x64xbf16, #tpu.memory_space<vmem>>, vector<1x27x64xbf16>
    %3 = vector.shape_cast %2 : vector<1x27x64xbf16> to vector<27x64xbf16>
    %cst = arith.constant dense<0.000000e+00> : vector<256x64xf32>
    %4 = tpu.matmul %1, %3, %cst {dimension_numbers = #tpu.dot_dimension_numbers<[1], [0], [0], [1], [0, 0, 1, 1], [], []>} : vector<256x27xbf16>, vector<27x64xbf16>, vector<256x64xf32> -> vector<256x64xf32>
    %c0_5 = arith.constant 0 : index
    %c0_6 = arith.constant 0 : index
    %c0_7 = arith.constant 0 : index
    %5 = vector.load %arg4[%c0_5, %c0_6, %c0_7] : memref<1x1x64xf32, #tpu.memory_space<vmem>>, vector<1x1x64xf32>
    %6 = vector.shape_cast %5 : vector<1x1x64xf32> to vector<1x64xf32>
    %7 = vector.broadcast %6 : vector<1x64xf32> to vector<256x64xf32>
    %8 = arith.mulf %4, %7 : vector<256x64xf32>
    %c0_8 = arith.constant 0 : index
    %c0_9 = arith.constant 0 : index
    %c0_10 = arith.constant 0 : index
    %9 = vector.load %arg5[%c0_8, %c0_9, %c0_10] : memref<1x1x64xf32, #tpu.memory_space<vmem>>, vector<1x1x64xf32>
    %10 = vector.shape_cast %9 : vector<1x1x64xf32> to vector<1x64xf32>
    %11 = vector.broadcast %10 : vector<1x64xf32> to vector<256x64xf32>
    %12 = arith.addf %8, %11 : vector<256x64xf32>
    %cst_11 = arith.constant 0.000000e+00 : f32
    %13 = vector.broadcast %cst_11 : f32 to vector<256x64xf32>
    %14 = arith.maximumf %12, %13 : vector<256x64xf32>
    %c0_12 = arith.constant 0 : index
    %c0_13 = arith.constant 0 : index
    %c0_14 = arith.constant 0 : index
    %15 = vector.load %arg6[%c0_12, %c0_13, %c0_14] : memref<1x256x64xf32, #tpu.memory_space<vmem>>, vector<1x256x64xf32>
    %16 = vector.shape_cast %15 : vector<1x256x64xf32> to vector<256x64xf32>
    %17 = vector.shape_cast %14 : vector<256x64xf32> to vector<1x256x64xf32>
    tpu.vector_store %arg6[%c0_12, %c0_13, %c0_14], %17 {strides = array<i32>} : memref<1x256x64xf32, #tpu.memory_space<vmem>>, vector<1x256x64xf32>,
    return
  }
  func.func @transform_0(%arg0: i32, %arg1: i32) -> (i32, i32, i32) {
    %c0_i32 = arith.constant 0 : i32
    %c0_i32_0 = arith.constant 0 : i32
    return %arg0, %arg1, %c0_i32 : i32, i32, i32
  }
  func.func @transform_1(%arg0: i32, %arg1: i32) -> (i32, i32, i32) {
    %c0_i32 = arith.constant 0 : i32
    %c0_i32_0 = arith.constant 0 : i32
    %c0_i32_1 = arith.constant 0 : i32
    return %arg0, %c0_i32, %c0_i32_0 : i32, i32, i32
  }
  func.func @transform_2(%arg0: i32, %arg1: i32) -> (i32, i32, i32) {
    %c0_i32 = arith.constant 0 : i32
    %c0_i32_0 = arith.constant 0 : i32
    %c0_i32_1 = arith.constant 0 : i32
    return %arg0, %c0_i32, %c0_i32_0 : i32, i32, i32
  }
  func.func @transform_3(%arg0: i32, %arg1: i32) -> (i32, i32, i32) {
    %c0_i32 = arith.constant 0 : i32
    %c0_i32_0 = arith.constant 0 : i32
    %c0_i32_1 = arith.constant 0 : i32
    return %arg0, %c0_i32, %c0_i32_0 : i32, i32, i32
  }
  func.func @transform_4(%arg0: i32, %arg1: i32) -> (i32, i32, i32) {
    %c0_i32 = arith.constant 0 : i32
    %c0_i32_0 = arith.constant 0 : i32
    return %arg0, %arg1, %c0_i32 : i32, i32, i32
  }
}

</mosaic_0001>

<llo_original>
// kernel: tpu_custom_call.1
$region0: #{tpu_custom_call.1}
  #allocation0 [shape = 'u32[]', space=smem, size = 0x4, offset = 0x4, fixed_abs, tag = 'smem constant byte address 0x4 - core index']
  #allocation1 [shape = 'u32[144,128]{1,0:T(1,128)}', space=vmem, size = 0x12000, scoped, tag = 'internal scratch']
  %s0 = inlined_call_operand.vmem [shape: bf16[1,512,27], index: 0, kind: input, shape index: {}]
  %s1 = inlined_call_operand.vmem [shape: bf16[1,27,64], index: 1, kind: input, shape index: {}]
  %s2 = inlined_call_operand.vmem [shape: f32[1,1,64], index: 2, kind: input, shape index: {}]
  %s3 = inlined_call_operand.vmem [shape: f32[1,1,64], index: 3, kind: input, shape index: {}]
  %s4 = inlined_call_operand.vmem [shape: f32[1,512,64], index: 4, kind: output, shape index: {}]
  %s5 = sld [smem:[#allocation0]]
  $region49: #{tpu_custom_call.1} parent=0
    _
  %s7 = ssub.s32 1, %s5
  %s8 = scalar_select 0, %s7, %s5
  loop: start=0, step=1, limit=4
  $region2: #{tpu_custom_call.1} parent=0 // loop_pre_header
    _
  $region3: #{tpu_custom_call.1} parent=0 // loop_header
    %s10 = sphi 0, %s14
    %p11 = scmp.ge.s32.totalorder %s10, 4
    %s17 = sphi 0, %s29
    %s18 = sphi 0, %s25
    %s19 = sphi 0, %s17
    %s20 = sphi 0, %s18
    %s21 = sphi 0, %s19
    %s22 = sphi 0, %s20
    %s34 = sphi 0, %s36
    %s37 = sphi 0, %s34
    %s38 = sphi 0, %s37
    %s54 = sphi 0, %s38
    %s60 = sphi 0, %s62
    %s63 = sphi 0, %s60
    %s64 = sphi 0, %s63
    %s80 = sphi 0, %s64
    %s86 = sphi 0, %s88
    %s89 = sphi 0, %s86
    %s90 = sphi 0, %s89
    %s106 = sphi 0, %s90
    %s112 = sphi 0, %s114
    %s115 = sphi 0, %s112
    %s116 = sphi 0, %s115
    %s132 = sphi 0, %s116
    %s140 = sphi 0, %s142
    %s143 = sphi 0, %s140
    %s144 = sphi 0, %s143
    %s160 = sphi 0, %s144
  $region4: #{tpu_custom_call.1} parent=0 // loop_header_branch
    %13 = sbr.rel (%p11) target = $region8
  $region5: #{tpu_custom_call.1} parent=0 // loop_body
    %s15 = ssub.s32 %s10, 1
    %s16 = ssub.s32 %s10, 2
    %s23 = sadd.s32 1, %s18
    %p24 = scmp.ge.s32.totalorder %s23, 2
    %s25 = scalar_select %p24, 0, %s23
    %s26 = sadd.s32 1, %s17
    %s27 = scalar_select %p24, %s26, %s17
    %p28 = scmp.ge.s32.totalorder %s27, 1
    %s29 = scalar_select %p28, 0, %s27
    %s30 = ssub.s32 %s17, %s29
    %s31 = ssub.s32 %s18, %s25
    %s32 = sor.u32 %s30, %s31
    %p33 = scmp.eq.s32.totalorder %s32, 0
    %s35 = sadd.s32 %s34, 1
    %s36 = scalar_select %p33, %s34, %s35
    %p39 = pneg %p33
    %p40 = scmp.eq.s32.totalorder %s10, 1
    %p41 = por %p39, %p40
    %p42 = scmp.ne.s32.totalorder %s34, %s37
    %p43 = scmp.eq.s32.totalorder %s10, 0
    %p44 = por %p42, %p43
    %p45 = scmp.ne.s32.totalorder %s34, %s37
    %p46 = scmp.eq.s32.totalorder %s15, 1
    %p47 = por %p45, %p46
    %p48 = scmp.ne.s32.totalorder %s37, %s38
    %p49 = scmp.eq.s32.totalorder %s15, 0
    %p50 = por %p48, %p49
    %p51 = scmp.ne.s32.totalorder %s37, %s38
    %p52 = scmp.eq.s32.totalorder %s16, 1
    %p53 = por %p51, %p52
    %p55 = scmp.ne.s32.totalorder %s38, %s54
    %p56 = scmp.eq.s32.totalorder %s16, 0
    %p57 = por %p55, %p56
    %s58 = ssub.s32 %s17, %s29
    %p59 = scmp.eq.s32.totalorder %s58, 0
    %s61 = sadd.s32 %s60, 1
    %s62 = scalar_select %p59, %s60, %s61
    %p65 = pneg %p59
    %p66 = scmp.eq.s32.totalorder %s10, 1
    %p67 = por %p65, %p66
    %p68 = scmp.ne.s32.totalorder %s60, %s63
    %p69 = scmp.eq.s32.totalorder %s10, 0
    %p70 = por %p68, %p69
    %p71 = scmp.ne.s32.totalorder %s60, %s63
    %p72 = scmp.eq.s32.totalorder %s15, 1
    %p73 = por %p71, %p72
    %p74 = scmp.ne.s32.totalorder %s63, %s64
    %p75 = scmp.eq.s32.totalorder %s15, 0
    %p76 = por %p74, %p75
    %p77 = scmp.ne.s32.totalorder %s63, %s64
    %p78 = scmp.eq.s32.totalorder %s16, 1
    %p79 = por %p77, %p78
    %p81 = scmp.ne.s32.totalorder %s64, %s80
    %p82 = scmp.eq.s32.totalorder %s16, 0
    %p83 = por %p81, %p82
    %s84 = ssub.s32 %s17, %s29
    %p85 = scmp.eq.s32.totalorder %s84, 0
    %s87 = sadd.s32 %s86, 1
    %s88 = scalar_select %p85, %s86, %s87
    %p91 = pneg %p85
    %p92 = scmp.eq.s32.totalorder %s10, 1
    %p93 = por %p91, %p92
    %p94 = scmp.ne.s32.totalorder %s86, %s89
    %p95 = scmp.eq.s32.totalorder %s10, 0
    %p96 = por %p94, %p95
    %p97 = scmp.ne.s32.totalorder %s86, %s89
    %p98 = scmp.eq.s32.totalorder %s15, 1
    %p99 = por %p97, %p98
    %p100 = scmp.ne.s32.totalorder %s89, %s90
    %p101 = scmp.eq.s32.totalorder %s15, 0
    %p102 = por %p100, %p101
    %p103 = scmp.ne.s32.totalorder %s89, %s90
    %p104 = scmp.eq.s32.totalorder %s16, 1
    %p105 = por %p103, %p104
    %p107 = scmp.ne.s32.totalorder %s90, %s106
    %p108 = scmp.eq.s32.totalorder %s16, 0
    %p109 = por %p107, %p108
    %s110 = ssub.s32 %s17, %s29
    %p111 = scmp.eq.s32.totalorder %s110, 0
    %s113 = sadd.s32 %s112, 1
    %s114 = scalar_select %p111, %s112, %s113
    %p117 = pneg %p111
    %p118 = scmp.eq.s32.totalorder %s10, 1
    %p119 = por %p117, %p118
    %p120 = scmp.ne.s32.totalorder %s112, %s115
    %p121 = scmp.eq.s32.totalorder %s10, 0
    %p122 = por %p120, %p121
    %p123 = scmp.ne.s32.totalorder %s112, %s115
    %p124 = scmp.eq.s32.totalorder %s15, 1
    %p125 = por %p123, %p124
    %p126 = scmp.ne.s32.totalorder %s115, %s116
    %p127 = scmp.eq.s32.totalorder %s15, 0
    %p128 = por %p126, %p127
    %p129 = scmp.ne.s32.totalorder %s115, %s116
    %p130 = scmp.eq.s32.totalorder %s16, 1
    %p131 = por %p129, %p130
    %p133 = scmp.ne.s32.totalorder %s116, %s132
    %p134 = scmp.eq.s32.totalorder %s16, 0
    %p135 = por %p133, %p134
    %s136 = ssub.s32 %s17, %s29
    %s137 = ssub.s32 %s18, %s25
    %s138 = sor.u32 %s136, %s137
    %p139 = scmp.eq.s32.totalorder %s138, 0
    %s141 = sadd.s32 %s140, 1
    %s142 = scalar_select %p139, %s140, %s141
    %p145 = pneg %p139
    %p146 = scmp.eq.s32.totalorder %s10, 1
    %p147 = por %p145, %p146
    %p148 = scmp.ne.s32.totalorder %s140, %s143
    %p149 = scmp.eq.s32.totalorder %s10, 0
    %p150 = por %p148, %p149
    %p151 = scmp.ne.s32.totalorder %s140, %s143
    %p152 = scmp.eq.s32.totalorder %s15, 1
    %p153 = por %p151, %p152
    %p154 = scmp.ne.s32.totalorder %s143, %s144
    %p155 = scmp.eq.s32.totalorder %s15, 0
    %p156 = por %p154, %p155
    %p157 = scmp.ne.s32.totalorder %s143, %s144
    %p158 = scmp.eq.s32.totalorder %s16, 1
    %p159 = por %p157, %p158
    %p161 = scmp.ne.s32.totalorder %s144, %s160
    %p162 = scmp.eq.s32.totalorder %s16, 0
    %p163 = por %p161, %p162
    %p164 = scmp.le.s32.totalorder 1, %s10
    %p165 = scmp.lt.s32.totalorder %s10, 3
    %p166 = pnand %p164, %p165
    %p167 = pneg %p166
    // Predicated region
    $region9: #{tpu_custom_call.1} parent=5 // pred_check
      _
    $region10: #{tpu_custom_call.1} parent=5 // pred_check_branch
      %169 = sbr.rel (%p166) target = $region12
    $region11: #{tpu_custom_call.1} parent=5 // pred_region
      %s170 = ssub.s32 %s10, 1
      // Predicated region
      $region13: #{tpu_custom_call.1} parent=11 // pred_check
        %p171 = pneg %p76
      $region14: #{tpu_custom_call.1} parent=11 // pred_check_branch
        %173 = sbr.rel (%p171) target = $region16
      $region15: #{tpu_custom_call.1} parent=11 // pred_region
        %p174 = scmp.lt.s32.totalorder %s19, 0
        %s175 = scalar_select %p174, %s19, 0
        %s176 = smul.addr %s175, 4
        %s177 = smul.addr %s176, 4
        %s178 = scalar_lea.vmem %s1, %s177
      $region16: #{tpu_custom_call.1} parent=11 // pred_fallthru
        _
      // Predicated region
      $region17: #{tpu_custom_call.1} parent=11 // pred_check
        %p179 = pneg %p102
      $region18: #{tpu_custom_call.1} parent=11 // pred_check_branch
        %181 = sbr.rel (%p179) target = $region20
      $region19: #{tpu_custom_call.1} parent=11 // pred_region
        %p182 = scmp.lt.s32.totalorder %s19, 0
        %s183 = scalar_select %p182, %s19, 0
        %s184 = scalar_lea.vmem %s2, %s183
      $region20: #{tpu_custom_call.1} parent=11 // pred_fallthru
        _
      // Predicated region
      $region21: #{tpu_custom_call.1} parent=11 // pred_check
        %p185 = pneg %p128
      $region22: #{tpu_custom_call.1} parent=11 // pred_check_branch
        %187 = sbr.rel (%p185) target = $region24
      $region23: #{tpu_custom_call.1} parent=11 // pred_region
        %p188 = scmp.lt.s32.totalorder %s19, 0
        %s189 = scalar_select %p188, %s19, 0
        %s190 = scalar_lea.vmem %s3, %s189
      $region24: #{tpu_custom_call.1} parent=11 // pred_fallthru
        _
    $region12: #{tpu_custom_call.1} parent=5 // pred_fallthru
      _
    %p191 = scmp.lt.s32.totalorder %s10, 2
    // Predicated region
    $region25: #{tpu_custom_call.1} parent=5 // pred_check
      %p192 = pneg %p191
    $region26: #{tpu_custom_call.1} parent=5 // pred_check_branch
      %194 = sbr.rel (%p192) target = $region28
    $region27: #{tpu_custom_call.1} parent=5 // pred_region
      // Predicated region
      $region29: #{tpu_custom_call.1} parent=27 // pred_check
        %p195 = pneg %p44
      $region30: #{tpu_custom_call.1} parent=27 // pred_check_branch
        %197 = sbr.rel (%p195) target = $region32
      $region31: #{tpu_custom_call.1} parent=27 // pred_region
        %s198 = smul.u32 32, %s18
        %p199 = scmp.lt.s32.totalorder %s17, 0
        %s200 = scalar_select %p199, %s17, 0
        %p201 = scmp.lt.s32.totalorder %s198, 63
        %s202 = scalar_select %p201, %s198, 63
        %s203 = smul.addr %s200, 64
        %s204 = sadd.s32 %s202, %s203
        %s205 = smul.addr %s204, 4
        %s206 = scalar_lea.vmem %s0, %s205
        %s207 = smul.u32 32, %s18
      $region32: #{tpu_custom_call.1} parent=27 // pred_fallthru
        _
    $region28: #{tpu_custom_call.1} parent=5 // pred_fallthru
      _
    %p208 = scmp.le.s32.totalorder 1, %s10
    %p209 = scmp.lt.s32.totalorder %s10, 3
    %p210 = pnand %p208, %p209
    %p211 = pneg %p210
    // Predicated region
    $region33: #{tpu_custom_call.1} parent=5 // pred_check
      _
    $region34: #{tpu_custom_call.1} parent=5 // pred_check_branch
      %213 = sbr.rel (%p210) target = $region36
    $region35: #{tpu_custom_call.1} parent=5 // pred_region
      %s214 = ssub.s32 %s10, 1
      %s215 = smul.u32 32, %s20
      %p216 = scmp.lt.s32.totalorder %s19, 0
      %s217 = scalar_select %p216, %s19, 0
      %p218 = scmp.lt.s32.totalorder %s215, 63
      %s219 = scalar_select %p218, %s215, 63
      %s220 = smul.addr %s217, 64
      %s221 = sadd.s32 %s219, %s220
      %s222 = smul.addr %s221, 4
      %s223 = scalar_lea.vmem %s0, %s222
      %p224 = pneg %p50
      %p225 = pneg %p47
      %p226 = scmp.lt.s32.totalorder %s19, 0
      %s227 = scalar_select %p226, %s19, 0
      %s228 = smul.addr %s227, 4
      %s229 = smul.addr %s228, 4
      %s230 = scalar_lea.vmem %s1, %s229
      %p231 = pneg %p76
      %p232 = pneg %p73
      %p233 = scmp.lt.s32.totalorder %s19, 0
      %s234 = scalar_select %p233, %s19, 0
      %s235 = scalar_lea.vmem %s2, %s234
      %p236 = pneg %p102
      %p237 = pneg %p99
      %p238 = scmp.lt.s32.totalorder %s19, 0
      %s239 = scalar_select %p238, %s19, 0
      %s240 = scalar_lea.vmem %s3, %s239
      %p241 = pneg %p128
      %p242 = pneg %p125
      %p243 = pneg %p156
      %p244 = pneg %p153
      %s245 = smul.u32 32, %s20
      %p246 = scmp.lt.s32.totalorder %s19, 0
      %s247 = scalar_select %p246, %s19, 0
      %p248 = scmp.lt.s32.totalorder %s245, 63
      %s249 = scalar_select %p248, %s245, 63
      %s250 = smul.addr %s247, 64
      %s251 = sadd.s32 %s249, %s250
      %s252 = smul.addr %s251, 8
      %s253 = scalar_lea.vmem %s4, %s252
      %s254 = smul.u32 32, %s20
      %p255 = scmp.lt.s32.totalorder %s19, 0
      %s256 = scalar_select %p255, %s19, 0
      %p257 = scmp.lt.s32.totalorder %s254, 63
      %s258 = scalar_select %p257, %s254, 63
      %s259 = smul.addr %s256, 64
      %s260 = sadd.s32 %s258, %s259
      %s261 = smul.addr %s260, 4
      %s262 = scalar_lea.vmem %s0, %s261
      %s263 = smul.u32 32, %s20
      %p264 = scmp.lt.s32.totalorder %s19, 0
      %s265 = scalar_select %p264, %s19, 0
      %s266 = smul.addr %s265, 4
      %s267 = smul.addr %s266, 4
      %s268 = scalar_lea.vmem %s1, %s267
      %p269 = scmp.lt.s32.totalorder %s19, 0
      %s270 = scalar_select %p269, %s19, 0
      %s271 = scalar_lea.vmem %s2, %s270
      %p272 = scmp.lt.s32.totalorder %s19, 0
      %s273 = scalar_select %p272, %s19, 0
      %s274 = scalar_lea.vmem %s3, %s273
      %s275 = smul.u32 32, %s20
      %p276 = scmp.lt.s32.totalorder %s19, 0
      %s277 = scalar_select %p276, %s19, 0
      %p278 = scmp.lt.s32.totalorder %s275, 63
      %s279 = scalar_select %p278, %s275, 63
      %s280 = smul.addr %s277, 64
      %s281 = sadd.s32 %s279, %s280
      %s282 = smul.addr %s281, 8
      %s283 = scalar_lea.vmem %s4, %s282
      %s284 = smul.u32 32, %s20
      %v286 = vld [vmem:[%s262] sm:$0xf]
      %v287 = vld [vmem:[%s262 + $0x4] sm:$0xf]
      %v288 = vld [vmem:[%s262 + $0x8] sm:$0xf]
      %v289 = vld [vmem:[%s262 + $0xc] sm:$0xf]
      %v290 = vld [vmem:[%s262 + $0x10] sm:$0xf]
      %v291 = vld [vmem:[%s262 + $0x14] sm:$0xf]
      %v292 = vld [vmem:[%s262 + $0x18] sm:$0xf]
      %v293 = vld [vmem:[%s262 + $0x1c] sm:$0xf]
      %v294 = vld [vmem:[%s262 + $0x20] sm:$0xf]
      %v295 = vld [vmem:[%s262 + $0x24] sm:$0xf]
      %v296 = vld [vmem:[%s262 + $0x28] sm:$0xf]
      %v297 = vld [vmem:[%s262 + $0x2c] sm:$0xf]
      %v298 = vld [vmem:[%s262 + $0x30] sm:$0xf]
      %v299 = vld [vmem:[%s262 + $0x34] sm:$0xf]
      %v300 = vld [vmem:[%s262 + $0x38] sm:$0xf]
      %v301 = vld [vmem:[%s262 + $0x3c] sm:$0xf]
      %v302 = vld [vmem:[%s262 + $0x40] sm:$0xf]
      %v303 = vld [vmem:[%s262 + $0x44] sm:$0xf]
      %v304 = vld [vmem:[%s262 + $0x48] sm:$0xf]
      %v305 = vld [vmem:[%s262 + $0x4c] sm:$0xf]
      %v306 = vld [vmem:[%s262 + $0x50] sm:$0xf]
      %v307 = vld [vmem:[%s262 + $0x54] sm:$0xf]
      %v308 = vld [vmem:[%s262 + $0x58] sm:$0xf]
      %v309 = vld [vmem:[%s262 + $0x5c] sm:$0xf]
      %v310 = vld [vmem:[%s262 + $0x60] sm:$0xf]
      %v311 = vld [vmem:[%s262 + $0x64] sm:$0xf]
      %v312 = vld [vmem:[%s262 + $0x68] sm:$0xf]
      %v313 = vld [vmem:[%s262 + $0x6c] sm:$0xf]
      %v314 = vld [vmem:[%s262 + $0x70] sm:$0xf]
      %v315 = vld [vmem:[%s262 + $0x74] sm:$0xf]
      %v316 = vld [vmem:[%s262 + $0x78] sm:$0xf]
      %v317 = vld [vmem:[%s262 + $0x7c] sm:$0xf]
      %v318 = vld [vmem:[%s268] sm:$0xf]
      %v319 = vld [vmem:[%s268 + $0x4] sm:$0xf]
      %v320 = vld [vmem:[%s268 + $0x8] sm:$0xf]
      %v321 = vld [vmem:[%s268 + $0xc] sm:$0x3]
      %v354 = vunpack.c.l.b16 %v286
      %v355 = vunpack.c.l.b16 %v287
      %v356 = vunpack.c.l.b16 %v288
      %v357 = vunpack.c.l.b16 %v289
      %v358 = vunpack.c.l.b16 %v290
      %v359 = vunpack.c.l.b16 %v291
      %v360 = vunpack.c.l.b16 %v292
      %v361 = vunpack.c.l.b16 %v293
      %v362 = vunpack.c.l.b16 %v294
      %v363 = vunpack.c.l.b16 %v295
      %v364 = vunpack.c.l.b16 %v296
      %v365 = vunpack.c.l.b16 %v297
      %v366 = vunpack.c.l.b16 %v298
      %v367 = vunpack.c.l.b16 %v299
      %v368 = vunpack.c.l.b16 %v300
      %v369 = vunpack.c.l.b16 %v301
      %v370 = vunpack.c.l.b16 %v302
      %v371 = vunpack.c.l.b16 %v303
      %v372 = vunpack.c.l.b16 %v304
      %v373 = vunpack.c.l.b16 %v305
      %v374 = vunpack.c.l.b16 %v306
      %v375 = vunpack.c.l.b16 %v307
      %v376 = vunpack.c.l.b16 %v308
      %v377 = vunpack.c.l.b16 %v309
      %v378 = vunpack.c.l.b16 %v310
      %v379 = vunpack.c.l.b16 %v311
      %v380 = vunpack.c.l.b16 %v312
      %v381 = vunpack.c.l.b16 %v313
      %v382 = vunpack.c.l.b16 %v314
      %v383 = vunpack.c.l.b16 %v315
      %v384 = vunpack.c.l.b16 %v316
      %v385 = vunpack.c.l.b16 %v317
      %v386 = vpack.c.b16 %v355, %v354
      %v387 = vpack.c.b16 %v357, %v356
      %v388 = vpack.c.b16 %v359, %v358
      %v389 = vpack.c.b16 %v361, %v360
      %v390 = vpack.c.b16 %v363, %v362
      %v391 = vpack.c.b16 %v365, %v364
      %v392 = vpack.c.b16 %v367, %v366
      %v393 = vpack.c.b16 %v369, %v368
      %v394 = vpack.c.b16 %v371, %v370
      %v395 = vpack.c.b16 %v373, %v372
      %v396 = vpack.c.b16 %v375, %v374
      %v397 = vpack.c.b16 %v377, %v376
      %v398 = vpack.c.b16 %v379, %v378
      %v399 = vpack.c.b16 %v381, %v380
      %v400 = vpack.c.b16 %v383, %v382
      %v401 = vpack.c.b16 %v385, %v384
      %v406 = vunpack.c.l.b16 %v318
      %v407 = vunpack.c.l.b16 %v319
      %v408 = vunpack.c.l.b16 %v320
      %v409 = vunpack.c.l.b16 %v321
      %v410 = vpack.c.b16 %v407, %v406
      %v411 = vpack.c.b16 %v409, %v408
      %vm413 = vcmask 220160
      %v415 = vsel %vm413, %v386, 0
      %v418 = vsel %vm413, %v387, 0
      %v421 = vsel %vm413, %v388, 0
      %v424 = vsel %vm413, %v389, 0
      %v427 = vsel %vm413, %v390, 0
      %v430 = vsel %vm413, %v391, 0
      %v433 = vsel %vm413, %v392, 0
      %v436 = vsel %vm413, %v393, 0
      %v439 = vsel %vm413, %v394, 0
      %v442 = vsel %vm413, %v395, 0
      %v445 = vsel %vm413, %v396, 0
      %v448 = vsel %vm413, %v397, 0
      %v451 = vsel %vm413, %v398, 0
      %v454 = vsel %vm413, %v399, 0
      %v457 = vsel %vm413, %v400, 0
      %v460 = vsel %vm413, %v401, 0
      %vm462 = vcmask 1044480
      %vm463 = vcmask 1045504
      %v464 = vsel %vm462, 4294967295, 65535
      %v465 = vsel %vm463, %v464, 0
      %v467 = vand.u32 %v411, %v465
      %469 = vmatprep.subr.bf16.mxu0 0
      %470 = vmatpush1.bf16.msra.mxu0 %v410
      %471 = vmatprep.subr.bf16.mxu0 0
      %472 = vmatpush1.bf16.msra.mxu0 %v467
      %473 = vmatprep.subr.bf16.mxu0 0
      %474 = vmatpush1.bf16.msra.mxu0 0
      %475 = vmatprep.subr.bf16.mxu0 0
      %476 = vmatpush1.bf16.msra.mxu0 0
      %477 = vmatprep.subr.bf16.mxu0 0
      %478 = vmatpush1.bf16.msra.mxu0 0
      %479 = vmatprep.subr.bf16.mxu0 0
      %480 = vmatpush1.bf16.msra.mxu0 0
      %481 = vmatprep.subr.bf16.mxu0 0
      %482 = vmatpush1.bf16.msra.mxu0 0
      %483 = vmatprep.subr.bf16.mxu0 0
      %484 = vmatpush1.bf16.msra.mxu0 0
      %485 = vmatprep.subr.bf16.mxu0 0
      %486 = vmatpush1.bf16.msra.mxu0 0
      %487 = vmatprep.subr.bf16.mxu0 0
      %488 = vmatpush1.bf16.msra.mxu0 0
      %489 = vmatprep.subr.bf16.mxu0 0
      %490 = vmatpush1.bf16.msra.mxu0 0
      %491 = vmatprep.subr.bf16.mxu0 0
      %492 = vmatpush1.bf16.msra.mxu0 0
      %493 = vmatprep.subr.bf16.mxu0 0
      %494 = vmatpush1.bf16.msra.mxu0 0
      %495 = vmatprep.subr.bf16.mxu0 0
      %496 = vmatpush1.bf16.msra.mxu0 0
      %497 = vmatprep.subr.bf16.mxu0 0
      %498 = vmatpush1.bf16.msra.mxu0 0
      %499 = vmatprep.subr.bf16.mxu0 0
      %500 = vmatpush1.bf16.msra.mxu0 0
      %501 = vmatprep.mubr.bf16.mxu0 0
      %502 = vmatmul.mubr.bf16.gmra.mrb[0].mxu0 %v415
      %v503 = vpop.f32.mrb[0].mxu0
      %v504 = vadd.f32 0.0, %v503
      %v505 = vpop.f32.mrb[0].mxu0
      %v506 = vpop.f32.mrb[0].mxu0
      %v507 = vadd.f32 0.0, %v506
      %v508 = vpop.f32.mrb[0].mxu0
      %509 = vmatprep.mubr.bf16.mxu0 0
      %510 = vmatmul.mubr.bf16.gmra.mrb[0].mxu0 %v418
      %v511 = vpop.f32.mrb[0].mxu0
      %v512 = vadd.f32 0.0, %v511
      %v513 = vpop.f32.mrb[0].mxu0
      %v514 = vpop.f32.mrb[0].mxu0
      %v515 = vadd.f32 0.0, %v514
      %v516 = vpop.f32.mrb[0].mxu0
      %517 = vmatprep.mubr.bf16.mxu0 0
      %518 = vmatmul.mubr.bf16.gmra.mrb[0].mxu0 %v421
      %v519 = vpop.f32.mrb[0].mxu0
      %v520 = vadd.f32 0.0, %v519
      %v521 = vpop.f32.mrb[0].mxu0
      %v522 = vpop.f32.mrb[0].mxu0
      %v523 = vadd.f32 0.0, %v522
      %v524 = vpop.f32.mrb[0].mxu0
      %525 = vmatprep.mubr.bf16.mxu0 0
      %526 = vmatmul.mubr.bf16.gmra.mrb[0].mxu0 %v424
      %v527 = vpop.f32.mrb[0].mxu0
      %v528 = vadd.f32 0.0, %v527
      %v529 = vpop.f32.mrb[0].mxu0
      %v530 = vpop.f32.mrb[0].mxu0
      %v531 = vadd.f32 0.0, %v530
      %v532 = vpop.f32.mrb[0].mxu0
      %533 = vmatprep.mubr.bf16.mxu0 0
      %534 = vmatmul.mubr.bf16.gmra.mrb[0].mxu0 %v427
      %v535 = vpop.f32.mrb[0].mxu0
      %v536 = vadd.f32 0.0, %v535
      %v537 = vpop.f32.mrb[0].mxu0
      %v538 = vpop.f32.mrb[0].mxu0
      %v539 = vadd.f32 0.0, %v538
      %v540 = vpop.f32.mrb[0].mxu0
      %541 = vmatprep.mubr.bf16.mxu0 0
      %542 = vmatmul.mubr.bf16.gmra.mrb[0].mxu0 %v430
      %v543 = vpop.f32.mrb[0].mxu0
      %v544 = vadd.f32 0.0, %v543
      %v545 = vpop.f32.mrb[0].mxu0
      %v546 = vpop.f32.mrb[0].mxu0
      %v547 = vadd.f32 0.0, %v546
      %v548 = vpop.f32.mrb[0].mxu0
      %549 = vmatprep.mubr.bf16.mxu0 0
      %550 = vmatmul.mubr.bf16.gmra.mrb[0].mxu0 %v433
      %v551 = vpop.f32.mrb[0].mxu0
      %v552 = vadd.f32 0.0, %v551
      %v553 = vpop.f32.mrb[0].mxu0
      %v554 = vpop.f32.mrb[0].mxu0
      %v555 = vadd.f32 0.0, %v554
      %v556 = vpop.f32.mrb[0].mxu0
      %557 = vmatprep.mubr.bf16.mxu0 0
      %558 = vmatmul.mubr.bf16.gmra.mrb[0].mxu0 %v436
      %v559 = vpop.f32.mrb[0].mxu0
      %v560 = vadd.f32 0.0, %v559
      %v561 = vpop.f32.mrb[0].mxu0
      %v562 = vpop.f32.mrb[0].mxu0
      %v563 = vadd.f32 0.0, %v562
      %v564 = vpop.f32.mrb[0].mxu0
      %565 = vmatprep.mubr.bf16.mxu0 0
      %566 = vmatmul.mubr.bf16.gmra.mrb[0].mxu0 %v439
      %v567 = vpop.f32.mrb[0].mxu0
      %v568 = vadd.f32 0.0, %v567
      %v569 = vpop.f32.mrb[0].mxu0
      %v570 = vpop.f32.mrb[0].mxu0
      %v571 = vadd.f32 0.0, %v570
      %v572 = vpop.f32.mrb[0].mxu0
      %573 = vmatprep.mubr.bf16.mxu0 0
      %574 = vmatmul.mubr.bf16.gmra.mrb[0].mxu0 %v442
      %v575 = vpop.f32.mrb[0].mxu0
      %v576 = vadd.f32 0.0, %v575
      %v577 = vpop.f32.mrb[0].mxu0
      %v578 = vpop.f32.mrb[0].mxu0
      %v579 = vadd.f32 0.0, %v578
      %v580 = vpop.f32.mrb[0].mxu0
      %581 = vmatprep.mubr.bf16.mxu0 0
      %582 = vmatmul.mubr.bf16.gmra.mrb[0].mxu0 %v445
      %v583 = vpop.f32.mrb[0].mxu0
      %v584 = vadd.f32 0.0, %v583
      %v585 = vpop.f32.mrb[0].mxu0
      %v586 = vpop.f32.mrb[0].mxu0
      %v587 = vadd.f32 0.0, %v586
      %v588 = vpop.f32.mrb[0].mxu0
      %589 = vmatprep.mubr.bf16.mxu0 0
      %590 = vmatmul.mubr.bf16.gmra.mrb[0].mxu0 %v448
      %v591 = vpop.f32.mrb[0].mxu0
      %v592 = vadd.f32 0.0, %v591
      %v593 = vpop.f32.mrb[0].mxu0
      %v594 = vpop.f32.mrb[0].mxu0
      %v595 = vadd.f32 0.0, %v594
      %v596 = vpop.f32.mrb[0].mxu0
      %597 = vmatprep.mubr.bf16.mxu0 0
      %598 = vmatmul.mubr.bf16.gmra.mrb[0].mxu0 %v451
      %v599 = vpop.f32.mrb[0].mxu0
      %v600 = vadd.f32 0.0, %v599
      %v601 = vpop.f32.mrb[0].mxu0
      %v602 = vpop.f32.mrb[0].mxu0
      %v603 = vadd.f32 0.0, %v602
      %v604 = vpop.f32.mrb[0].mxu0
      %605 = vmatprep.mubr.bf16.mxu0 0
      %606 = vmatmul.mubr.bf16.gmra.mrb[0].mxu0 %v454
      %v607 = vpop.f32.mrb[0].mxu0
      %v608 = vadd.f32 0.0, %v607
      %v609 = vpop.f32.mrb[0].mxu0
      %v610 = vpop.f32.mrb[0].mxu0
      %v611 = vadd.f32 0.0, %v610
      %v612 = vpop.f32.mrb[0].mxu0
      %613 = vmatprep.mubr.bf16.mxu0 0
      %614 = vmatmul.mubr.bf16.gmra.mrb[0].mxu0 %v457
      %v615 = vpop.f32.mrb[0].mxu0
      %v616 = vadd.f32 0.0, %v615
      %v617 = vpop.f32.mrb[0].mxu0
      %v618 = vpop.f32.mrb[0].mxu0
      %v619 = vadd.f32 0.0, %v618
      %v620 = vpop.f32.mrb[0].mxu0
      %621 = vmatprep.mubr.bf16.mxu0 0
      %622 = vmatmul.mubr.bf16.gmra.mrb[0].mxu0 %v460
      %v623 = vpop.f32.mrb[0].mxu0
      %v624 = vadd.f32 0.0, %v623
      %v625 = vpop.f32.mrb[0].mxu0
      %v626 = vpop.f32.mrb[0].mxu0
      %v627 = vadd.f32 0.0, %v626
      %v628 = vpop.f32.mrb[0].mxu0
      %629 = vdwg.mxu0
      %v630 = vld [vmem:[%s271] sm:$0x1]
      %v632 = vlaneseq
      %v633 = vshrl.u32 %v632, 7
      %v634 = vsub.s32 0, %v633
      %v635 = vrot.slane %v630, %v634
      %v637 = vmul.f32 %v504, %v635
      %v638 = vmul.f32 %v507, %v635
      %v639 = vmul.f32 %v512, %v635
      %v640 = vmul.f32 %v515, %v635
      %v641 = vmul.f32 %v520, %v635
      %v642 = vmul.f32 %v523, %v635
      %v643 = vmul.f32 %v528, %v635
      %v644 = vmul.f32 %v531, %v635
      %v645 = vmul.f32 %v536, %v635
      %v646 = vmul.f32 %v539, %v635
      %v647 = vmul.f32 %v544, %v635
      %v648 = vmul.f32 %v547, %v635
      %v649 = vmul.f32 %v552, %v635
      %v650 = vmul.f32 %v555, %v635
      %v651 = vmul.f32 %v560, %v635
      %v652 = vmul.f32 %v563, %v635
      %v653 = vmul.f32 %v568, %v635
      %v654 = vmul.f32 %v571, %v635
      %v655 = vmul.f32 %v576, %v635
      %v656 = vmul.f32 %v579, %v635
      %v657 = vmul.f32 %v584, %v635
      %v658 = vmul.f32 %v587, %v635
      %v659 = vmul.f32 %v592, %v635
      %v660 = vmul.f32 %v595, %v635
      %v661 = vmul.f32 %v600, %v635
      %v662 = vmul.f32 %v603, %v635
      %v663 = vmul.f32 %v608, %v635
      %v664 = vmul.f32 %v611, %v635
      %v665 = vmul.f32 %v616, %v635
      %v666 = vmul.f32 %v619, %v635
      %v667 = vmul.f32 %v624, %v635
      %v668 = vmul.f32 %v627, %v635
      %v669 = vld [vmem:[%s274] sm:$0x1]
      %v671 = vlaneseq
      %v672 = vshrl.u32 %v671, 7
      %v673 = vsub.s32 0, %v672
      %v674 = vrot.slane %v669, %v673
      %v676 = vadd.f32 %v637, %v674
      %v677 = vadd.f32 %v638, %v674
      %v678 = vadd.f32 %v639, %v674
      %v679 = vadd.f32 %v640, %v674
      %v680 = vadd.f32 %v641, %v674
      %v681 = vadd.f32 %v642, %v674
      %v682 = vadd.f32 %v643, %v674
      %v683 = vadd.f32 %v644, %v674
      %v684 = vadd.f32 %v645, %v674
      %v685 = vadd.f32 %v646, %v674
      %v686 = vadd.f32 %v647, %v674
      %v687 = vadd.f32 %v648, %v674
      %v688 = vadd.f32 %v649, %v674
      %v689 = vadd.f32 %v650, %v674
      %v690 = vadd.f32 %v651, %v674
      %v691 = vadd.f32 %v652, %v674
      %v692 = vadd.f32 %v653, %v674
      %v693 = vadd.f32 %v654, %v674
      %v694 = vadd.f32 %v655, %v674
      %v695 = vadd.f32 %v656, %v674
      %v696 = vadd.f32 %v657, %v674
      %v697 = vadd.f32 %v658, %v674
      %v698 = vadd.f32 %v659, %v674
      %v699 = vadd.f32 %v660, %v674
      %v700 = vadd.f32 %v661, %v674
      %v701 = vadd.f32 %v662, %v674
      %v702 = vadd.f32 %v663, %v674
      %v703 = vadd.f32 %v664, %v674
      %v704 = vadd.f32 %v665, %v674
      %v705 = vadd.f32 %v666, %v674
      %v706 = vadd.f32 %v667, %v674
      %v707 = vadd.f32 %v668, %v674
      %v708 = vmax.f32 %v676, 0.0
      %v709 = vmax.f32 %v677, 0.0
      %v710 = vmax.f32 %v678, 0.0
      %v711 = vmax.f32 %v679, 0.0
      %v712 = vmax.f32 %v680, 0.0
      %v713 = vmax.f32 %v681, 0.0
      %v714 = vmax.f32 %v682, 0.0
      %v715 = vmax.f32 %v683, 0.0
      %v716 = vmax.f32 %v684, 0.0
      %v717 = vmax.f32 %v685, 0.0
      %v718 = vmax.f32 %v686, 0.0
      %v719 = vmax.f32 %v687, 0.0
      %v720 = vmax.f32 %v688, 0.0
      %v721 = vmax.f32 %v689, 0.0
      %v722 = vmax.f32 %v690, 0.0
      %v723 = vmax.f32 %v691, 0.0
      %v724 = vmax.f32 %v692, 0.0
      %v725 = vmax.f32 %v693, 0.0
      %v726 = vmax.f32 %v694, 0.0
      %v727 = vmax.f32 %v695, 0.0
      %v728 = vmax.f32 %v696, 0.0
      %v729 = vmax.f32 %v697, 0.0
      %v730 = vmax.f32 %v698, 0.0
      %v731 = vmax.f32 %v699, 0.0
      %v732 = vmax.f32 %v700, 0.0
      %v733 = vmax.f32 %v701, 0.0
      %v734 = vmax.f32 %v702, 0.0
      %v735 = vmax.f32 %v703, 0.0
      %v736 = vmax.f32 %v704, 0.0
      %v737 = vmax.f32 %v705, 0.0
      %v738 = vmax.f32 %v706, 0.0
      %v739 = vmax.f32 %v707, 0.0
      %vm740 = vcmask 523264
      %741 = vst.msk [vmem:[%s283] sm:$0xff] %vm740, %v708
      %742 = vst.msk [vmem:[%s283 + $0x8] sm:$0xff] %vm740, %v709
      %743 = vst.msk [vmem:[%s283 + $0x10] sm:$0xff] %vm740, %v710
      %744 = vst.msk [vmem:[%s283 + $0x18] sm:$0xff] %vm740, %v711
      %745 = vst.msk [vmem:[%s283 + $0x20] sm:$0xff] %vm740, %v712
      %746 = vst.msk [vmem:[%s283 + $0x28] sm:$0xff] %vm740, %v713
      %747 = vst.msk [vmem:[%s283 + $0x30] sm:$0xff] %vm740, %v714
      %748 = vst.msk [vmem:[%s283 + $0x38] sm:$0xff] %vm740, %v715
      %749 = vst.msk [vmem:[%s283 + $0x40] sm:$0xff] %vm740, %v716
      %750 = vst.msk [vmem:[%s283 + $0x48] sm:$0xff] %vm740, %v717
      %751 = vst.msk [vmem:[%s283 + $0x50] sm:$0xff] %vm740, %v718
      %752 = vst.msk [vmem:[%s283 + $0x58] sm:$0xff] %vm740, %v719
      %753 = vst.msk [vmem:[%s283 + $0x60] sm:$0xff] %vm740, %v720
      %754 = vst.msk [vmem:[%s283 + $0x68] sm:$0xff] %vm740, %v721
      %755 = vst.msk [vmem:[%s283 + $0x70] sm:$0xff] %vm740, %v722
      %756 = vst.msk [vmem:[%s283 + $0x78] sm:$0xff] %vm740, %v723
      %757 = vst.msk [vmem:[%s283 + $0x80] sm:$0xff] %vm740, %v724
      %758 = vst.msk [vmem:[%s283 + $0x88] sm:$0xff] %vm740, %v725
      %759 = vst.msk [vmem:[%s283 + $0x90] sm:$0xff] %vm740, %v726
      %760 = vst.msk [vmem:[%s283 + $0x98] sm:$0xff] %vm740, %v727
      %761 = vst.msk [vmem:[%s283 + $0xa0] sm:$0xff] %vm740, %v728
      %762 = vst.msk [vmem:[%s283 + $0xa8] sm:$0xff] %vm740, %v729
      %763 = vst.msk [vmem:[%s283 + $0xb0] sm:$0xff] %vm740, %v730
      %764 = vst.msk [vmem:[%s283 + $0xb8] sm:$0xff] %vm740, %v731
      %765 = vst.msk [vmem:[%s283 + $0xc0] sm:$0xff] %vm740, %v732
      %766 = vst.msk [vmem:[%s283 + $0xc8] sm:$0xff] %vm740, %v733
      %767 = vst.msk [vmem:[%s283 + $0xd0] sm:$0xff] %vm740, %v734
      %768 = vst.msk [vmem:[%s283 + $0xd8] sm:$0xff] %vm740, %v735
      %769 = vst.msk [vmem:[%s283 + $0xe0] sm:$0xff] %vm740, %v736
      %770 = vst.msk [vmem:[%s283 + $0xe8] sm:$0xff] %vm740, %v737
      %771 = vst.msk [vmem:[%s283 + $0xf0] sm:$0xff] %vm740, %v738
      %772 = vst.msk [vmem:[%s283 + $0xf8] sm:$0xff] %vm740, %v739
      %s773 = smul.u32 32, %s20
      %p774 = scmp.lt.s32.totalorder %s19, 0
      %s775 = scalar_select %p774, %s19, 0
      %p776 = scmp.lt.s32.totalorder %s773, 63
      %s777 = scalar_select %p776, %s773, 63
      %s778 = smul.addr %s775, 64
      %s779 = sadd.s32 %s777, %s778
      %s780 = smul.addr %s779, 8
      %s781 = scalar_lea.vmem %s4, %s780
      // Predicated region
      $region37: #{tpu_custom_call.1} parent=35 // pred_check
        %p782 = pneg %p153
      $region38: #{tpu_custom_call.1} parent=35 // pred_check_branch
        %784 = sbr.rel (%p782) target = $region40
      $region39: #{tpu_custom_call.1} parent=35 // pred_region
        %s785 = smul.u32 32, %s20
      $region40: #{tpu_custom_call.1} parent=35 // pred_fallthru
        _
    $region36: #{tpu_custom_call.1} parent=5 // pred_fallthru
      _
    %p786 = scmp.le.s32.totalorder 2, %s10
    // Predicated region
    $region41: #{tpu_custom_call.1} parent=5 // pred_check
      %p787 = pneg %p786
    $region42: #{tpu_custom_call.1} parent=5 // pred_check_branch
      %789 = sbr.rel (%p787) target = $region44
    $region43: #{tpu_custom_call.1} parent=5 // pred_region
      %s790 = ssub.s32 %s10, 2
      // Predicated region
      $region45: #{tpu_custom_call.1} parent=43 // pred_check
        %p791 = pneg %p159
      $region46: #{tpu_custom_call.1} parent=43 // pred_check_branch
        %793 = sbr.rel (%p791) target = $region48
      $region47: #{tpu_custom_call.1} parent=43 // pred_region
        %s794 = smul.u32 32, %s22
        %p795 = scmp.lt.s32.totalorder %s21, 0
        %s796 = scalar_select %p795, %s21, 0
        %p797 = scmp.lt.s32.totalorder %s794, 63
        %s798 = scalar_select %p797, %s794, 63
        %s799 = smul.addr %s796, 64
        %s800 = sadd.s32 %s798, %s799
        %s801 = smul.addr %s800, 8
        %s802 = scalar_lea.vmem %s4, %s801
      $region48: #{tpu_custom_call.1} parent=43 // pred_fallthru
        _
    $region44: #{tpu_custom_call.1} parent=5 // pred_fallthru
      _
  $region6: #{tpu_custom_call.1} parent=0 // loop_footer
    %s14 = sadd.s32 1, %s10
  $region7: #{tpu_custom_call.1} parent=0 // loop_footer_branch
    %9 = sbr.rel target = $region3
  $region8: #{tpu_custom_call.1} parent=0 // loop_exit
    _

</llo_original>
